<compile_context>
chip_gen: v5e
topology: v5e:2x2
jax: 0.10.0
libtpu: 0.0.40
codegen_flags: <defaults>
</compile_context>

<pallas_src>
import functools
import math

import jax
import jax.numpy as jnp
from jax.experimental import pallas as pl
from jax.experimental.pallas import tpu as pltpu

LANE = 128  # TPU lane width; padded hidden2 / output class dims.


def _gcn_kernel(x_ref, adj_ref,
                w1_ref, b1_ref, w2_ref, b2_ref, w3_ref, b3_ref,
                out_ref, *, n_valid):
    """Fused 3-layer GCN for one grid step (G graphs folded together).

    x_ref   : (M, F_in)  bf16, M = G*N flattened node rows
    adj_ref : (M, M)     bf16 block-diagonal, row-normalized adjacency
    w*_ref  : bf16 weights (W2 cols / W3 rows+cols zero-padded to LANE)
    b*_ref  : f32 [1, F_out] bias rows (b2/b3 zero-padded to LANE)
    out_ref : (M, LANE)  bf16, lane-dense; columns >= n_valid are zeroed
    """
    adj = adj_ref[...]  # bf16, reused by all three layers

    def graph_conv(h_bf16, w_ref, b_ref):
        # support = h @ W, then aggregate: adj @ support + b (f32 accumulation)
        support = jnp.dot(h_bf16, w_ref[...], preferred_element_type=jnp.float32)
        agg = jnp.dot(adj, support.astype(jnp.bfloat16),
                      preferred_element_type=jnp.float32)
        return agg + b_ref[...]

    h = graph_conv(x_ref[...], w1_ref, b1_ref)
    h = jnp.maximum(h, 0.0).astype(jnp.bfloat16)        # ReLU (dropout1 = identity)

    h = graph_conv(h, w2_ref, b2_ref)
    h = jnp.maximum(h, 0.0).astype(jnp.bfloat16)        # ReLU (dropout2 = identity)

    logits = graph_conv(h, w3_ref, b3_ref)               # (M, LANE) f32, padded cols == 0

    # LogSoftmax over the valid (un-padded) class columns only, in f32.
    col = jax.lax.broadcasted_iota(jnp.int32, logits.shape, 1)
    valid = col < n_valid
    masked = jnp.where(valid, logits, jnp.float32(-1e30))
    m = jnp.max(masked, axis=-1, keepdims=True)
    shifted = masked - m
    lse = jnp.log(jnp.sum(jnp.exp(shifted), axis=-1, keepdims=True))
    out_ref[...] = jnp.where(valid, shifted - lse, 0.0).astype(out_ref.dtype)


def _block_diag(adj_groups, dtype):
    """(S, G, N, N) per-graph adjacencies -> (S, G*N, G*N) block-diagonal."""
    s, g, n, _ = adj_groups.shape
    eye = jnp.eye(g, dtype=dtype)
    t = adj_groups.astype(dtype)[:, :, :, None, :] * eye[None, :, None, :, None]
    return t.reshape(s, g * n, g * n)


def gcn_forward(x, adj, params, *, graphs_per_step=None):
    """Batched fused 3-layer GCN forward.

    x   : (B, N, F_in) float
    adj : (B, N, N)    float (dense adjacency per graph)
    Returns (B, N, n_outputs) float32 log-probabilities.
    """
    B, N, f_in = x.shape
    h1 = params["w1"].shape[1]
    h2 = params["w2"].shape[1]
    n_out = params["w3"].shape[1]
    assert n_out <= LANE and h2 <= LANE

    if graphs_per_step is None:
        # Target G*N ~ 256 (v6e/v7x MXU contraction width), capped by B, and pick
        # the largest divisor of B.  On v7x, pass graphs_per_step=B//2 to keep a
        # 2-long "parallel" grid axis for both TensorCores.
        g = max(1, min(B, 256 // max(N, 1)))
        while B % g:
            g -= 1
        graphs_per_step = max(g, 1)
    G = graphs_per_step
    assert B % G == 0, "graphs_per_step must divide the batch"
    n_steps = B // G
    M = G * N
    assert n_steps == 1 or M % 8 == 0, "per-step row count must be sublane-aligned"

    # bf16 matmul operands (f32 accumulation in-kernel); f32 biases.
    x_flat = x.reshape(B * N, f_in).astype(jnp.bfloat16)
    adj_bd = _block_diag(adj.reshape(n_steps, G, N, N), jnp.bfloat16)

    w1 = params["w1"].astype(jnp.bfloat16)
    b1 = params["b1"].astype(jnp.float32).reshape(1, h1)
    # hidden2 padded to LANE: padded columns stay exactly zero through relu.
    w2 = jnp.zeros((h1, LANE), jnp.bfloat16).at[:, :h2].set(
        params["w2"].astype(jnp.bfloat16))
    b2 = jnp.zeros((1, LANE), jnp.float32).at[:, :h2].set(
        params["b2"].astype(jnp.float32).reshape(1, h2))
    # W3 padded on both dims: rows match padded hidden2, cols give lane-dense output.
    w3 = jnp.zeros((LANE, LANE), jnp.bfloat16).at[:h2, :n_out].set(
        params["w3"].astype(jnp.bfloat16))
    b3 = jnp.zeros((1, LANE), jnp.float32).at[:, :n_out].set(
        params["b3"].astype(jnp.float32).reshape(1, n_out))

    flops_per_step = 2 * (M * f_in * h1 + M * M * h1 +
                          M * h1 * LANE + M * M * LANE +
                          M * LANE * LANE + M * M * LANE)
    bytes_accessed = (x_flat.size * 2 + adj_bd.size * 2 +
                      (w1.size + w2.size + w3.size) * 2 +
                      (b1.size + b2.size + b3.size) * 4 +
                      B * N * LANE * 2)

    def shared(shape):      # weights/biases: same full block for every grid step
        return pl.BlockSpec(shape, lambda s: (0, 0))

    out_padded = pl.pallas_call(
        functools.partial(_gcn_kernel, n_valid=n_out),
        out_shape=jax.ShapeDtypeStruct((B * N, LANE), jnp.bfloat16),
        grid_spec=pltpu.PrefetchScalarGridSpec(
            num_scalar_prefetch=0,
            grid=(n_steps,),
            in_specs=[pl.BlockSpec((M, f_in), lambda s: (s, 0)),        # x rows
                      pl.BlockSpec((None, M, M), lambda s: (s, 0, 0)),  # block-diag adj
                      shared((f_in, h1)), shared((1, h1)),
                      shared((h1, LANE)), shared((1, LANE)),
                      shared((LANE, LANE)), shared((1, LANE))],
            out_specs=pl.BlockSpec((M, LANE), lambda s: (s, 0)),
        ),
        compiler_params=pltpu.CompilerParams(
            dimension_semantics=("parallel",)),
        cost_estimate=pl.CostEstimate(
            flops=n_steps * flops_per_step,
            transcendentals=n_steps * M * LANE,
            bytes_accessed=bytes_accessed),
    )(x_flat, adj_bd, w1, b1, w2, b2, w3, b3)

    out = out_padded.reshape(B, N, LANE)[:, :, :n_out]
    return out.astype(jnp.float32)


def init_params(key, n_inputs, n_outputs, n_hiddens1=128, n_hiddens2=64):
    """Deterministic init matching GraphConvolution.reset_parameters:
    uniform(-stdv, stdv) with stdv = 1/sqrt(out_features)."""
    def layer(k, fan_in, fan_out):
        kw, kb = jax.random.split(k)
        stdv = 1.0 / math.sqrt(fan_out)
        w = jax.random.uniform(kw, (fan_in, fan_out), jnp.float32, -stdv, stdv)
        b = jax.random.uniform(kb, (1, fan_out), jnp.float32, -stdv, stdv)
        return w, b

    k1, k2, k3 = jax.random.split(key, 3)
    w1, b1 = layer(k1, n_inputs, n_hiddens1)
    w2, b2 = layer(k2, n_hiddens1, n_hiddens2)
    w3, b3 = layer(k3, n_hiddens2, n_outputs)
    return dict(w1=w1, b1=b1, w2=w2, b2=b2, w3=w3, b3=b3)


def gcn_forward_ref_f32(x, adj, p):
    """Pure-f32 JAX reference (module semantics)."""
    def layer(h, w, b):
        return jnp.einsum("bij,bjo->bio", adj, jnp.einsum("bnf,fo->bno", h, w)) + b
    h = jnp.maximum(layer(x, p["w1"], p["b1"]), 0.0)
    h = jnp.maximum(layer(h, p["w2"], p["b2"]), 0.0)
    logits = layer(h, p["w3"], p["b3"])
    return jax.nn.log_softmax(logits, axis=-1)


def gcn_forward_ref_bf16(x, adj, p):
    """Reference mimicking the kernel's bf16-operand / f32-accumulation numerics
    (output store is still f32 here; the kernel additionally rounds the final
    log-probs to bf16, hence the looser tolerance in the test below)."""
    bf = lambda a: a.astype(jnp.bfloat16)
    adj_bf = bf(adj)

    def layer(h, w, b):
        s = jnp.einsum("bnf,fo->bno", bf(h), bf(w),
                       preferred_element_type=jnp.float32)
        return jnp.einsum("bij,bjo->bio", adj_bf, bf(s),
                          preferred_element_type=jnp.float32) + b

    h = jnp.maximum(layer(x, p["w1"], p["b1"]), 0.0)
    h = jnp.maximum(layer(h, p["w2"], p["b2"]), 0.0)
    logits = layer(h, p["w3"], p["b3"])
    return jax.nn.log_softmax(logits, axis=-1)


if __name__ == "__main__":
    B = 8           # graphs per call (all folded into one grid step here: M = 128 rows)
    N = 16          # nodes per graph
    n_inputs = 32   # input feature dim
    n_outputs = 8   # number of classes

    key = jax.random.PRNGKey(0)
    k_x, k_adj, k_p = jax.random.split(key, 3)

    x = jax.random.normal(k_x, (B, N, n_inputs), jnp.float32)

    # Symmetric, row-normalized dense adjacency with self loops, per graph.
    a = (jax.random.uniform(k_adj, (B, N, N)) < 0.3).astype(jnp.float32)
    a = jnp.clip(a + jnp.swapaxes(a, -1, -2) + jnp.eye(N, dtype=jnp.float32), 0.0, 1.0)
    adj = a / jnp.sum(a, axis=-1, keepdims=True)

    params = init_params(k_p, n_inputs, n_outputs)

    out = jax.block_until_ready(gcn_forward(x, adj, params))
    ref_bf16 = gcn_forward_ref_bf16(x, adj, params)
    ref_f32 = gcn_forward_ref_f32(x, adj, params)

    assert out.shape == (B, N, n_outputs)
    # Kernel stores log-probs in bf16 (lane-dense writeback), so allow bf16-level
    # absolute error vs the bf16-matmul-emulating reference.
    assert jnp.allclose(out, ref_bf16, atol=2e-2, rtol=2e-2), \
        "mismatch vs bf16-emulating reference"
    assert jnp.allclose(out, ref_f32, atol=5e-2, rtol=5e-2), \
        "mismatch vs f32 reference"
    print("KERNEL_OK")
</pallas_src>

<mosaic_0001>
module attributes {stable_mosaic.version = 11 : i64} {
  func.func @_gcn_kernel(%arg0: i32, %arg1: memref<128x32xbf16, #tpu.memory_space<vmem>>, %arg2: memref<1x128x128xbf16, #tpu.memory_space<vmem>>, %arg3: memref<32x128xbf16, #tpu.memory_space<vmem>>, %arg4: memref<1x128xf32, #tpu.memory_space<vmem>>, %arg5: memref<128x128xbf16, #tpu.memory_space<vmem>>, %arg6: memref<1x128xf32, #tpu.memory_space<vmem>>, %arg7: memref<128x128xbf16, #tpu.memory_space<vmem>>, %arg8: memref<1x128xf32, #tpu.memory_space<vmem>>, %arg9: memref<128x128xbf16, #tpu.memory_space<vmem>>) attributes {dimension_semantics = [#tpu.dimension_semantics<parallel>], iteration_bounds = array<i64: 1>, scalar_prefetch = 0 : i64, scratch_operands = 0 : i64, tpu.core_type = #tpu.core_type<tc>, window_params = [{transform_indices = @transform_0, window_bounds = array<i64: 128, 32>}, {transform_indices = @transform_1, window_bounds = array<i64: 1, 128, 128>}, {pipeline_mode = #tpu.pipeline_mode<synchronous>, transform_indices = @transform_2, window_bounds = array<i64: 32, 128>}, {pipeline_mode = #tpu.pipeline_mode<synchronous>, transform_indices = @transform_3, window_bounds = array<i64: 1, 128>}, {pipeline_mode = #tpu.pipeline_mode<synchronous>, transform_indices = @transform_4, window_bounds = array<i64: 128, 128>}, {pipeline_mode = #tpu.pipeline_mode<synchronous>, transform_indices = @transform_5, window_bounds = array<i64: 1, 128>}, {pipeline_mode = #tpu.pipeline_mode<synchronous>, transform_indices = @transform_6, window_bounds = array<i64: 128, 128>}, {pipeline_mode = #tpu.pipeline_mode<synchronous>, transform_indices = @transform_7, window_bounds = array<i64: 1, 128>}, {transform_indices = @transform_8, window_bounds = array<i64: 128, 128>}]} {
    %c0 = arith.constant 0 : index
    %c0_0 = arith.constant 0 : index
    %c0_1 = arith.constant 0 : index
    %0 = vector.load %arg2[%c0, %c0_0, %c0_1] : memref<1x128x128xbf16, #tpu.memory_space<vmem>>, vector<1x128x128xbf16>
    %1 = vector.shape_cast %0 : vector<1x128x128xbf16> to vector<128x128xbf16>
    %c0_2 = arith.constant 0 : index
    %c0_3 = arith.constant 0 : index
    %2 = vector.load %arg1[%c0_2, %c0_3] : memref<128x32xbf16, #tpu.memory_space<vmem>>, vector<128x32xbf16>
    %c0_4 = arith.constant 0 : index
    %c0_5 = arith.constant 0 : index
    %3 = vector.load %arg3[%c0_4, %c0_5] : memref<32x128xbf16, #tpu.memory_space<vmem>>, vector<32x128xbf16>
    %cst = arith.constant dense<0.000000e+00> : vector<128x128xf32>
    %4 = tpu.matmul %2, %3, %cst {dimension_numbers = #tpu.dot_dimension_numbers<[1], [0], [0], [1], [0, 0, 1, 1], [], []>} : vector<128x32xbf16>, vector<32x128xbf16>, vector<128x128xf32> -> vector<128x128xf32>
    %5 = arith.truncf %4 : vector<128x128xf32> to vector<128x128xbf16>
    %cst_6 = arith.constant dense<0.000000e+00> : vector<128x128xf32>
    %6 = tpu.matmul %1, %5, %cst_6 {dimension_numbers = #tpu.dot_dimension_numbers<[1], [0], [0], [1], [0, 0, 1, 1], [], []>} : vector<128x128xbf16>, vector<128x128xbf16>, vector<128x128xf32> -> vector<128x128xf32>
    %c0_7 = arith.constant 0 : index
    %c0_8 = arith.constant 0 : index
    %7 = vector.load %arg4[%c0_7, %c0_8] : memref<1x128xf32, #tpu.memory_space<vmem>>, vector<1x128xf32>
    %8 = vector.broadcast %7 : vector<1x128xf32> to vector<128x128xf32>
    %9 = arith.addf %6, %8 : vector<128x128xf32>
    %cst_9 = arith.constant 0.000000e+00 : f32
    %10 = vector.broadcast %cst_9 : f32 to vector<128x128xf32>
    %11 = arith.maximumf %9, %10 : vector<128x128xf32>
    %12 = arith.truncf %11 : vector<128x128xf32> to vector<128x128xbf16>
    %c0_10 = arith.constant 0 : index
    %c0_11 = arith.constant 0 : index
    %13 = vector.load %arg5[%c0_10, %c0_11] : memref<128x128xbf16, #tpu.memory_space<vmem>>, vector<128x128xbf16>
    %cst_12 = arith.constant dense<0.000000e+00> : vector<128x128xf32>
    %14 = tpu.matmul %12, %13, %cst_12 {dimension_numbers = #tpu.dot_dimension_numbers<[1], [0], [0], [1], [0, 0, 1, 1], [], []>} : vector<128x128xbf16>, vector<128x128xbf16>, vector<128x128xf32> -> vector<128x128xf32>
    %15 = arith.truncf %14 : vector<128x128xf32> to vector<128x128xbf16>
    %cst_13 = arith.constant dense<0.000000e+00> : vector<128x128xf32>
    %16 = tpu.matmul %1, %15, %cst_13 {dimension_numbers = #tpu.dot_dimension_numbers<[1], [0], [0], [1], [0, 0, 1, 1], [], []>} : vector<128x128xbf16>, vector<128x128xbf16>, vector<128x128xf32> -> vector<128x128xf32>
    %c0_14 = arith.constant 0 : index
    %c0_15 = arith.constant 0 : index
    %17 = vector.load %arg6[%c0_14, %c0_15] : memref<1x128xf32, #tpu.memory_space<vmem>>, vector<1x128xf32>
    %18 = vector.broadcast %17 : vector<1x128xf32> to vector<128x128xf32>
    %19 = arith.addf %16, %18 : vector<128x128xf32>
    %cst_16 = arith.constant 0.000000e+00 : f32
    %20 = vector.broadcast %cst_16 : f32 to vector<128x128xf32>
    %21 = arith.maximumf %19, %20 : vector<128x128xf32>
    %22 = arith.truncf %21 : vector<128x128xf32> to vector<128x128xbf16>
    %c0_17 = arith.constant 0 : index
    %c0_18 = arith.constant 0 : index
    %23 = vector.load %arg7[%c0_17, %c0_18] : memref<128x128xbf16, #tpu.memory_space<vmem>>, vector<128x128xbf16>
    %cst_19 = arith.constant dense<0.000000e+00> : vector<128x128xf32>
    %24 = tpu.matmul %22, %23, %cst_19 {dimension_numbers = #tpu.dot_dimension_numbers<[1], [0], [0], [1], [0, 0, 1, 1], [], []>} : vector<128x128xbf16>, vector<128x128xbf16>, vector<128x128xf32> -> vector<128x128xf32>
    %25 = arith.truncf %24 : vector<128x128xf32> to vector<128x128xbf16>
    %cst_20 = arith.constant dense<0.000000e+00> : vector<128x128xf32>
    %26 = tpu.matmul %1, %25, %cst_20 {dimension_numbers = #tpu.dot_dimension_numbers<[1], [0], [0], [1], [0, 0, 1, 1], [], []>} : vector<128x128xbf16>, vector<128x128xbf16>, vector<128x128xf32> -> vector<128x128xf32>
    %c0_21 = arith.constant 0 : index
    %c0_22 = arith.constant 0 : index
    %27 = vector.load %arg8[%c0_21, %c0_22] : memref<1x128xf32, #tpu.memory_space<vmem>>, vector<1x128xf32>
    %28 = vector.broadcast %27 : vector<1x128xf32> to vector<128x128xf32>
    %29 = arith.addf %26, %28 : vector<128x128xf32>
    %30 = tpu.iota {dimensions = array<i32: 1>} : vector<128x128xi32>
    %c8_i32 = arith.constant 8 : i32
    %31 = vector.broadcast %c8_i32 : i32 to vector<128x128xi32>
    %32 = arith.cmpi slt, %30, %31 : vector<128x128xi32>
    %cst_23 = arith.constant -1.000000e+30 : f32
    %33 = vector.broadcast %cst_23 : f32 to vector<128x128xf32>
    %34 = arith.select %32, %29, %33 : vector<128x128xi1>, vector<128x128xf32>
    %cst_24 = arith.constant dense<0xFF800000> : vector<128xf32>
    %35 = vector.multi_reduction <maximumf>, %34, %cst_24 [1] : vector<128x128xf32> to vector<128xf32>
    %36 = vector.shape_cast %35 : vector<128xf32> to vector<128x1xf32>
    %37 = vector.broadcast %36 : vector<128x1xf32> to vector<128x128xf32>
    %38 = arith.subf %34, %37 : vector<128x128xf32>
    %39 = math.exp %38 : vector<128x128xf32>
    %cst_25 = arith.constant dense<0.000000e+00> : vector<128xf32>
    %40 = vector.multi_reduction <add>, %39, %cst_25 [1] : vector<128x128xf32> to vector<128xf32>
    %41 = vector.shape_cast %40 : vector<128xf32> to vector<128x1xf32>
    %42 = math.log %41 : vector<128x1xf32>
    %43 = vector.broadcast %42 : vector<128x1xf32> to vector<128x128xf32>
    %44 = arith.subf %38, %43 : vector<128x128xf32>
    %cst_26 = arith.constant 0.000000e+00 : f32
    %45 = vector.broadcast %cst_26 : f32 to vector<128x128xf32>
    %46 = arith.select %32, %44, %45 : vector<128x128xi1>, vector<128x128xf32>
    %47 = arith.truncf %46 : vector<128x128xf32> to vector<128x128xbf16>
    %c0_27 = arith.constant 0 : index
    %c0_28 = arith.constant 0 : index
    %48 = vector.load %arg9[%c0_27, %c0_28] : memref<128x128xbf16, #tpu.memory_space<vmem>>, vector<128x128xbf16>
    tpu.vector_store %arg9[%c0_27, %c0_28], %47 {strides = array<i32>} : memref<128x128xbf16, #tpu.memory_space<vmem>>, vector<128x128xbf16>,
    return
  }
  func.func @transform_0(%arg0: i32) -> (i32, i32) {
    %c0_i32 = arith.constant 0 : i32
    %c0_i32_0 = arith.constant 0 : i32
    return %arg0, %c0_i32 : i32, i32
  }
  func.func @transform_1(%arg0: i32) -> (i32, i32, i32) {
    %c0_i32 = arith.constant 0 : i32
    %c0_i32_0 = arith.constant 0 : i32
    %c0_i32_1 = arith.constant 0 : i32
    return %arg0, %c0_i32, %c0_i32_0 : i32, i32, i32
  }
  func.func @transform_2(%arg0: i32) -> (i32, i32) {
    %c0_i32 = arith.constant 0 : i32
    %c0_i32_0 = arith.constant 0 : i32
    %c0_i32_1 = arith.constant 0 : i32
    return %c0_i32, %c0_i32_0 : i32, i32
  }
  func.func @transform_3(%arg0: i32) -> (i32, i32) {
    %c0_i32 = arith.constant 0 : i32
    %c0_i32_0 = arith.constant 0 : i32
    %c0_i32_1 = arith.constant 0 : i32
    return %c0_i32, %c0_i32_0 : i32, i32
  }
  func.func @transform_4(%arg0: i32) -> (i32, i32) {
    %c0_i32 = arith.constant 0 : i32
    %c0_i32_0 = arith.constant 0 : i32
    %c0_i32_1 = arith.constant 0 : i32
    return %c0_i32, %c0_i32_0 : i32, i32
  }
  func.func @transform_5(%arg0: i32) -> (i32, i32) {
    %c0_i32 = arith.constant 0 : i32
    %c0_i32_0 = arith.constant 0 : i32
    %c0_i32_1 = arith.constant 0 : i32
    return %c0_i32, %c0_i32_0 : i32, i32
  }
  func.func @transform_6(%arg0: i32) -> (i32, i32) {
    %c0_i32 = arith.constant 0 : i32
    %c0_i32_0 = arith.constant 0 : i32
    %c0_i32_1 = arith.constant 0 : i32
    return %c0_i32, %c0_i32_0 : i32, i32
  }
  func.func @transform_7(%arg0: i32) -> (i32, i32) {
    %c0_i32 = arith.constant 0 : i32
    %c0_i32_0 = arith.constant 0 : i32
    %c0_i32_1 = arith.constant 0 : i32
    return %c0_i32, %c0_i32_0 : i32, i32
  }
  func.func @transform_8(%arg0: i32) -> (i32, i32) {
    %c0_i32 = arith.constant 0 : i32
    %c0_i32_0 = arith.constant 0 : i32
    return %arg0, %c0_i32 : i32, i32
  }
}

</mosaic_0001>

<llo_original>
// kernel: tpu_custom_call.1
$region0: #{tpu_custom_call.1}
  #allocation0 [shape = 'u32[]', space=smem, size = 0x4, offset = 0x4, fixed_abs, tag = 'smem constant byte address 0x4 - core index']
  #allocation1 [shape = 'u32[72,128]{1,0:T(1,128)}', space=vmem, size = 0x9000, scoped, tag = 'internal scratch']
  %s0 = inlined_call_operand.vmem [shape: bf16[128,32], index: 0, kind: input, shape index: {}]
  %s1 = inlined_call_operand.vmem [shape: bf16[1,128,128], index: 1, kind: input, shape index: {}]
  %s2 = inlined_call_operand.vmem [shape: bf16[32,128], index: 2, kind: input, shape index: {}]
  %s3 = inlined_call_operand.vmem [shape: f32[1,128], index: 3, kind: input, shape index: {}]
  %s4 = inlined_call_operand.hbm [shape: bf16[128,128], index: 4, kind: input, shape index: {}]
  %s5 = inlined_call_operand.vmem [shape: f32[1,128], index: 5, kind: input, shape index: {}]
  %s6 = inlined_call_operand.hbm [shape: bf16[128,128], index: 6, kind: input, shape index: {}]
  %s7 = inlined_call_operand.vmem [shape: f32[1,128], index: 7, kind: input, shape index: {}]
  %s8 = inlined_call_operand.hbm [shape: bf16[128,128], index: 8, kind: output, shape index: {}]
  %s9 = sld [smem:[#allocation0]]
  $region50: #{tpu_custom_call.1} parent=0
    _
  %s11 = ssub.s32 1, %s9
  %s12 = scalar_select 0, %s11, %s9
  $region1: #{tpu_custom_call.1} parent=0
    #allocation2 [shape = 'u8[32768]{0}', space=vmem, size = 0x8000, scoped, tag = 'input window, operand 4, single buffered']
    #allocation3 [shape = 's32[1]{0}', space=sflag, size = 0x4, scoped, tag = 'scoped memory for tpu_custom_call.1']
    #allocation4 [shape = 's32[1]{0}', space=sflag, size = 0x4, scoped, tag = 'scoped memory for tpu_custom_call.1']
    #allocation5 [shape = 'u8[32768]{0}', space=vmem, size = 0x8000, scoped, tag = 'input window, operand 6, single buffered']
    #allocation6 [shape = 's32[1]{0}', space=sflag, size = 0x4, scoped, tag = 'scoped memory for tpu_custom_call.1']
    #allocation7 [shape = 'u8[32768]{0}', space=vmem, size = 0x8000, scoped, tag = 'output window, operand 0, single buffered']
    %13 = vsyncpa [#allocation3], 0
    %14 = vsyncpa [#allocation6], 0
    %15 = vsyncpa [#allocation4], 0
    // Predicated region
    $region2: #{tpu_custom_call.1} parent=1 // pred_check
      _
    $region3: #{tpu_custom_call.1} parent=1 // pred_check_branch
      %17 = sbr.rel (0) target = $region5
    $region4: #{tpu_custom_call.1} parent=1 // pred_region
      _
    $region5: #{tpu_custom_call.1} parent=1 // pred_fallthru
      _
    // Predicated region
    $region6: #{tpu_custom_call.1} parent=1 // pred_check
      _
    $region7: #{tpu_custom_call.1} parent=1 // pred_check_branch
      %19 = sbr.rel (0) target = $region9
    $region8: #{tpu_custom_call.1} parent=1 // pred_region
      _
    $region9: #{tpu_custom_call.1} parent=1 // pred_fallthru
      _
    // Predicated region
    $region10: #{tpu_custom_call.1} parent=1 // pred_check
      _
    $region11: #{tpu_custom_call.1} parent=1 // pred_check_branch
      %21 = sbr.rel (0) target = $region13
    $region12: #{tpu_custom_call.1} parent=1 // pred_region
      _
    $region13: #{tpu_custom_call.1} parent=1 // pred_fallthru
      _
    // Predicated region
    $region14: #{tpu_custom_call.1} parent=1 // pred_check
      _
    $region15: #{tpu_custom_call.1} parent=1 // pred_check_branch
      %23 = sbr.rel (0) target = $region17
    $region16: #{tpu_custom_call.1} parent=1 // pred_region
      _
    $region17: #{tpu_custom_call.1} parent=1 // pred_fallthru
      _
    // Predicated region
    $region18: #{tpu_custom_call.1} parent=1 // pred_check
      _
    $region19: #{tpu_custom_call.1} parent=1 // pred_check_branch
      %25 = sbr.rel (0) target = $region21
    $region20: #{tpu_custom_call.1} parent=1 // pred_region
      %27 = vsyncadd [#allocation3], 0
      %s28 = sshll.u32 %s4, 4
      %s29 = int_to_ptr.hbm [resolvable:$true] %s28
      %s30 = sshll.u32 [#allocation2], 4
      %s31 = int_to_ptr.vmem [resolvable:$true] %s30
      %36 = dma.hbm_to_vmem [thread:$0]  %s29, 1024, %s31, [#allocation3], 64, 64, 4
    $region21: #{tpu_custom_call.1} parent=1 // pred_fallthru
      _
    // Predicated region
    $region22: #{tpu_custom_call.1} parent=1 // pred_check
      _
    $region23: #{tpu_custom_call.1} parent=1 // pred_check_branch
      %38 = sbr.rel (0) target = $region25
    $region24: #{tpu_custom_call.1} parent=1 // pred_region
      _
    $region25: #{tpu_custom_call.1} parent=1 // pred_fallthru
      _
    // Predicated region
    $region26: #{tpu_custom_call.1} parent=1 // pred_check
      _
    $region27: #{tpu_custom_call.1} parent=1 // pred_check_branch
      %40 = sbr.rel (0) target = $region29
    $region28: #{tpu_custom_call.1} parent=1 // pred_region
      %42 = vsyncadd [#allocation6], 0
      %s43 = sshll.u32 %s6, 4
      %s44 = int_to_ptr.hbm [resolvable:$true] %s43
      %s45 = sshll.u32 [#allocation5], 4
      %s46 = int_to_ptr.vmem [resolvable:$true] %s45
      %51 = dma.hbm_to_vmem [thread:$0]  %s44, 1024, %s46, [#allocation6], 64, 64, 4
    $region29: #{tpu_custom_call.1} parent=1 // pred_fallthru
      _
    // Predicated region
    $region30: #{tpu_custom_call.1} parent=1 // pred_check
      _
    $region31: #{tpu_custom_call.1} parent=1 // pred_check_branch
      %53 = sbr.rel (0) target = $region33
    $region32: #{tpu_custom_call.1} parent=1 // pred_region
      _
    $region33: #{tpu_custom_call.1} parent=1 // pred_fallthru
      _
    // Predicated region
    $region34: #{tpu_custom_call.1} parent=1 // pred_check
      _
    $region35: #{tpu_custom_call.1} parent=1 // pred_check_branch
      %55 = sbr.rel (0) target = $region37
    $region36: #{tpu_custom_call.1} parent=1 // pred_region
      %57 = dma.done [#allocation3], 1024
    $region37: #{tpu_custom_call.1} parent=1 // pred_fallthru
      _
    // Predicated region
    $region38: #{tpu_custom_call.1} parent=1 // pred_check
      _
    $region39: #{tpu_custom_call.1} parent=1 // pred_check_branch
      %59 = sbr.rel (0) target = $region41
    $region40: #{tpu_custom_call.1} parent=1 // pred_region
      %61 = dma.done [#allocation6], 1024
    $region41: #{tpu_custom_call.1} parent=1 // pred_fallthru
      _
    %v63 = vld [vmem:[%s1] sm:$0xf]
    %v64 = vld [vmem:[%s1 + $0x4] sm:$0xf]
    %v65 = vld [vmem:[%s1 + $0x8] sm:$0xf]
    %v66 = vld [vmem:[%s1 + $0xc] sm:$0xf]
    %v67 = vld [vmem:[%s1 + $0x10] sm:$0xf]
    %v68 = vld [vmem:[%s1 + $0x14] sm:$0xf]
    %v69 = vld [vmem:[%s1 + $0x18] sm:$0xf]
    %v70 = vld [vmem:[%s1 + $0x1c] sm:$0xf]
    %v71 = vld [vmem:[%s1 + $0x20] sm:$0xf]
    %v72 = vld [vmem:[%s1 + $0x24] sm:$0xf]
    %v73 = vld [vmem:[%s1 + $0x28] sm:$0xf]
    %v74 = vld [vmem:[%s1 + $0x2c] sm:$0xf]
    %v75 = vld [vmem:[%s1 + $0x30] sm:$0xf]
    %v76 = vld [vmem:[%s1 + $0x34] sm:$0xf]
    %v77 = vld [vmem:[%s1 + $0x38] sm:$0xf]
    %v78 = vld [vmem:[%s1 + $0x3c] sm:$0xf]
    %v79 = vld [vmem:[%s0] sm:$0xf]
    %v80 = vld [vmem:[%s0 + $0x4] sm:$0xf]
    %v81 = vld [vmem:[%s0 + $0x8] sm:$0xf]
    %v82 = vld [vmem:[%s0 + $0xc] sm:$0xf]
    %v83 = vld [vmem:[%s0 + $0x10] sm:$0xf]
    %v84 = vld [vmem:[%s0 + $0x14] sm:$0xf]
    %v85 = vld [vmem:[%s0 + $0x18] sm:$0xf]
    %v86 = vld [vmem:[%s0 + $0x1c] sm:$0xf]
    %v87 = vld [vmem:[%s0 + $0x20] sm:$0xf]
    %v88 = vld [vmem:[%s0 + $0x24] sm:$0xf]
    %v89 = vld [vmem:[%s0 + $0x28] sm:$0xf]
    %v90 = vld [vmem:[%s0 + $0x2c] sm:$0xf]
    %v91 = vld [vmem:[%s0 + $0x30] sm:$0xf]
    %v92 = vld [vmem:[%s0 + $0x34] sm:$0xf]
    %v93 = vld [vmem:[%s0 + $0x38] sm:$0xf]
    %v94 = vld [vmem:[%s0 + $0x3c] sm:$0xf]
    %v95 = vld [vmem:[%s2] sm:$0xf]
    %v96 = vld [vmem:[%s2 + $0x4] sm:$0xf]
    %v97 = vld [vmem:[%s2 + $0x8] sm:$0xf]
    %v98 = vld [vmem:[%s2 + $0xc] sm:$0xf]
    %v115 = vunpack.c.l.b16 %v79
    %v116 = vunpack.c.l.b16 %v80
    %v117 = vunpack.c.l.b16 %v81
    %v118 = vunpack.c.l.b16 %v82
    %v119 = vunpack.c.l.b16 %v83
    %v120 = vunpack.c.l.b16 %v84
    %v121 = vunpack.c.l.b16 %v85
    %v122 = vunpack.c.l.b16 %v86
    %v123 = vunpack.c.l.b16 %v87
    %v124 = vunpack.c.l.b16 %v88
    %v125 = vunpack.c.l.b16 %v89
    %v126 = vunpack.c.l.b16 %v90
    %v127 = vunpack.c.l.b16 %v91
    %v128 = vunpack.c.l.b16 %v92
    %v129 = vunpack.c.l.b16 %v93
    %v130 = vunpack.c.l.b16 %v94
    %v131 = vpack.c.b16 %v116, %v115
    %v132 = vpack.c.b16 %v118, %v117
    %v133 = vpack.c.b16 %v120, %v119
    %v134 = vpack.c.b16 %v122, %v121
    %v135 = vpack.c.b16 %v124, %v123
    %v136 = vpack.c.b16 %v126, %v125
    %v137 = vpack.c.b16 %v128, %v127
    %v138 = vpack.c.b16 %v130, %v129
    %v143 = vunpack.c.l.b16 %v95
    %v144 = vunpack.c.l.b16 %v96
    %v145 = vunpack.c.l.b16 %v97
    %v146 = vunpack.c.l.b16 %v98
    %v147 = vpack.c.b16 %v144, %v143
    %v148 = vpack.c.b16 %v146, %v145
    %vm151 = vcmask 261120
    %v153 = vsel %vm151, %v131, 0
    %v156 = vsel %vm151, %v132, 0
    %v159 = vsel %vm151, %v133, 0
    %v162 = vsel %vm151, %v134, 0
    %v165 = vsel %vm151, %v135, 0
    %v168 = vsel %vm151, %v136, 0
    %v171 = vsel %vm151, %v137, 0
    %v174 = vsel %vm151, %v138, 0
    %176 = vmatpush.bf16.msra.mxu0 0
    %177 = vmatpush.bf16.msra.mxu0 0
    %178 = vmatpush.bf16.msra.mxu0 0
    %179 = vmatpush.bf16.msra.mxu0 0
    %180 = vmatpush.bf16.msra.mxu0 0
    %181 = vmatpush.bf16.msra.mxu0 0
    %182 = vmatpush.bf16.msra.mxu0 %v148
    %183 = vmatpush.bf16.msra.mxu0 %v147
    %184 = vmatmul.bf16.gmra.mxu0 %v153
    %v185 = vpop.f32.mrf.mxu0
    %v186 = vadd.f32 0.0, %v185
    %v187 = vpop.f32.mrf.mxu0
    %v188 = vadd.f32 0.0, %v187
    %189 = vmatmul.bf16.gmra.mxu0 %v156
    %v190 = vpop.f32.mrf.mxu0
    %v191 = vadd.f32 0.0, %v190
    %v192 = vpop.f32.mrf.mxu0
    %v193 = vadd.f32 0.0, %v192
    %194 = vmatmul.bf16.gmra.mxu0 %v159
    %v195 = vpop.f32.mrf.mxu0
    %v196 = vadd.f32 0.0, %v195
    %v197 = vpop.f32.mrf.mxu0
    %v198 = vadd.f32 0.0, %v197
    %199 = vmatmul.bf16.gmra.mxu0 %v162
    %v200 = vpop.f32.mrf.mxu0
    %v201 = vadd.f32 0.0, %v200
    %v202 = vpop.f32.mrf.mxu0
    %v203 = vadd.f32 0.0, %v202
    %204 = vmatmul.bf16.gmra.mxu0 %v165
    %v205 = vpop.f32.mrf.mxu0
    %v206 = vadd.f32 0.0, %v205
    %v207 = vpop.f32.mrf.mxu0
    %v208 = vadd.f32 0.0, %v207
    %209 = vmatmul.bf16.gmra.mxu0 %v168
    %v210 = vpop.f32.mrf.mxu0
    %v211 = vadd.f32 0.0, %v210
    %v212 = vpop.f32.mrf.mxu0
    %v213 = vadd.f32 0.0, %v212
    %214 = vmatmul.bf16.gmra.mxu0 %v171
    %v215 = vpop.f32.mrf.mxu0
    %v216 = vadd.f32 0.0, %v215
    %v217 = vpop.f32.mrf.mxu0
    %v218 = vadd.f32 0.0, %v217
    %219 = vmatmul.bf16.gmra.mxu0 %v174
    %v220 = vpop.f32.mrf.mxu0
    %v221 = vadd.f32 0.0, %v220
    %v222 = vpop.f32.mrf.mxu0
    %v223 = vadd.f32 0.0, %v222
    %224 = vdwg.mxu0
    %v225 = vpack.c.bf16 %v188, %v186
    %v226 = vpack.c.bf16 %v193, %v191
    %v227 = vpack.c.bf16 %v198, %v196
    %v228 = vpack.c.bf16 %v203, %v201
    %v229 = vpack.c.bf16 %v208, %v206
    %v230 = vpack.c.bf16 %v213, %v211
    %v231 = vpack.c.bf16 %v218, %v216
    %v232 = vpack.c.bf16 %v223, %v221
    %v233 = vld [vmem:[%s3] sm:$0x1]
    %v235 = vperm.slane %v233, 0
    %v253 = vunpack.c.l.b16 %v63
    %v254 = vunpack.c.l.b16 %v64
    %v255 = vunpack.c.l.b16 %v65
    %v256 = vunpack.c.l.b16 %v66
    %v257 = vunpack.c.l.b16 %v67
    %v258 = vunpack.c.l.b16 %v68
    %v259 = vunpack.c.l.b16 %v69
    %v260 = vunpack.c.l.b16 %v70
    %v261 = vunpack.c.l.b16 %v71
    %v262 = vunpack.c.l.b16 %v72
    %v263 = vunpack.c.l.b16 %v73
    %v264 = vunpack.c.l.b16 %v74
    %v265 = vunpack.c.l.b16 %v75
    %v266 = vunpack.c.l.b16 %v76
    %v267 = vunpack.c.l.b16 %v77
    %v268 = vunpack.c.l.b16 %v78
    %v269 = vpack.c.b16 %v254, %v253
    %v270 = vpack.c.b16 %v256, %v255
    %v271 = vpack.c.b16 %v258, %v257
    %v272 = vpack.c.b16 %v260, %v259
    %v273 = vpack.c.b16 %v262, %v261
    %v274 = vpack.c.b16 %v264, %v263
    %v275 = vpack.c.b16 %v266, %v265
    %v276 = vpack.c.b16 %v268, %v267
    %285 = vmatpush.bf16.msra.mxu0 %v232
    %286 = vmatpush.bf16.msra.mxu0 %v231
    %287 = vmatpush.bf16.msra.mxu0 %v230
    %288 = vmatpush.bf16.msra.mxu0 %v229
    %289 = vmatpush.bf16.msra.mxu0 %v228
    %290 = vmatpush.bf16.msra.mxu0 %v227
    %291 = vmatpush.bf16.msra.mxu0 %v226
    %292 = vmatpush.bf16.msra.mxu0 %v225
    %293 = vmatmul.bf16.gmra.mxu0 %v269
    %v294 = vpop.f32.mrf.mxu0
    %v295 = vadd.f32 %v235, %v294
    %v296 = vpop.f32.mrf.mxu0
    %v297 = vadd.f32 %v235, %v296
    %298 = vmatmul.bf16.gmra.mxu0 %v270
    %v299 = vpop.f32.mrf.mxu0
    %v300 = vadd.f32 %v235, %v299
    %v301 = vpop.f32.mrf.mxu0
    %v302 = vadd.f32 %v235, %v301
    %303 = vmatmul.bf16.gmra.mxu0 %v271
    %v304 = vpop.f32.mrf.mxu0
    %v305 = vadd.f32 %v235, %v304
    %v306 = vpop.f32.mrf.mxu0
    %v307 = vadd.f32 %v235, %v306
    %308 = vmatmul.bf16.gmra.mxu0 %v272
    %v309 = vpop.f32.mrf.mxu0
    %v310 = vadd.f32 %v235, %v309
    %v311 = vpop.f32.mrf.mxu0
    %v312 = vadd.f32 %v235, %v311
    %313 = vmatmul.bf16.gmra.mxu0 %v273
    %v314 = vpop.f32.mrf.mxu0
    %v315 = vadd.f32 %v235, %v314
    %v316 = vpop.f32.mrf.mxu0
    %v317 = vadd.f32 %v235, %v316
    %318 = vmatmul.bf16.gmra.mxu0 %v274
    %v319 = vpop.f32.mrf.mxu0
    %v320 = vadd.f32 %v235, %v319
    %v321 = vpop.f32.mrf.mxu0
    %v322 = vadd.f32 %v235, %v321
    %323 = vmatmul.bf16.gmra.mxu0 %v275
    %v324 = vpop.f32.mrf.mxu0
    %v325 = vadd.f32 %v235, %v324
    %v326 = vpop.f32.mrf.mxu0
    %v327 = vadd.f32 %v235, %v326
    %328 = vmatmul.bf16.gmra.mxu0 %v276
    %v329 = vpop.f32.mrf.mxu0
    %v330 = vadd.f32 %v235, %v329
    %v331 = vpop.f32.mrf.mxu0
    %v332 = vadd.f32 %v235, %v331
    %333 = vdwg.mxu0
    %v334 = vmax.f32 %v295, 0.0
    %v335 = vmax.f32 %v297, 0.0
    %v336 = vmax.f32 %v300, 0.0
    %v337 = vmax.f32 %v302, 0.0
    %v338 = vmax.f32 %v305, 0.0
    %v339 = vmax.f32 %v307, 0.0
    %v340 = vmax.f32 %v310, 0.0
    %v341 = vmax.f32 %v312, 0.0
    %v342 = vmax.f32 %v315, 0.0
    %v343 = vmax.f32 %v317, 0.0
    %v344 = vmax.f32 %v320, 0.0
    %v345 = vmax.f32 %v322, 0.0
    %v346 = vmax.f32 %v325, 0.0
    %v347 = vmax.f32 %v327, 0.0
    %v348 = vmax.f32 %v330, 0.0
    %v349 = vmax.f32 %v332, 0.0
    %v350 = vpack.c.bf16 %v335, %v334
    %v351 = vpack.c.bf16 %v337, %v336
    %v352 = vpack.c.bf16 %v339, %v338
    %v353 = vpack.c.bf16 %v341, %v340
    %v354 = vpack.c.bf16 %v343, %v342
    %v355 = vpack.c.bf16 %v345, %v344
    %v356 = vpack.c.bf16 %v347, %v346
    %v357 = vpack.c.bf16 %v349, %v348
    %v358 = vld [vmem:[#allocation2] sm:$0xf]
    %v359 = vld [vmem:[#allocation2 + $0x4] sm:$0xf]
    %v360 = vld [vmem:[#allocation2 + $0x8] sm:$0xf]
    %v361 = vld [vmem:[#allocation2 + $0xc] sm:$0xf]
    %v362 = vld [vmem:[#allocation2 + $0x10] sm:$0xf]
    %v363 = vld [vmem:[#allocation2 + $0x14] sm:$0xf]
    %v364 = vld [vmem:[#allocation2 + $0x18] sm:$0xf]
    %v365 = vld [vmem:[#allocation2 + $0x1c] sm:$0xf]
    %v366 = vld [vmem:[#allocation2 + $0x20] sm:$0xf]
    %v367 = vld [vmem:[#allocation2 + $0x24] sm:$0xf]
    %v368 = vld [vmem:[#allocation2 + $0x28] sm:$0xf]
    %v369 = vld [vmem:[#allocation2 + $0x2c] sm:$0xf]
    %v370 = vld [vmem:[#allocation2 + $0x30] sm:$0xf]
    %v371 = vld [vmem:[#allocation2 + $0x34] sm:$0xf]
    %v372 = vld [vmem:[#allocation2 + $0x38] sm:$0xf]
    %v373 = vld [vmem:[#allocation2 + $0x3c] sm:$0xf]
    %v390 = vunpack.c.l.b16 %v358
    %v391 = vunpack.c.l.b16 %v359
    %v392 = vunpack.c.l.b16 %v360
    %v393 = vunpack.c.l.b16 %v361
    %v394 = vunpack.c.l.b16 %v362
    %v395 = vunpack.c.l.b16 %v363
    %v396 = vunpack.c.l.b16 %v364
    %v397 = vunpack.c.l.b16 %v365
    %v398 = vunpack.c.l.b16 %v366
    %v399 = vunpack.c.l.b16 %v367
    %v400 = vunpack.c.l.b16 %v368
    %v401 = vunpack.c.l.b16 %v369
    %v402 = vunpack.c.l.b16 %v370
    %v403 = vunpack.c.l.b16 %v371
    %v404 = vunpack.c.l.b16 %v372
    %v405 = vunpack.c.l.b16 %v373
    %v406 = vpack.c.b16 %v391, %v390
    %v407 = vpack.c.b16 %v393, %v392
    %v408 = vpack.c.b16 %v395, %v394
    %v409 = vpack.c.b16 %v397, %v396
    %v410 = vpack.c.b16 %v399, %v398
    %v411 = vpack.c.b16 %v401, %v400
    %v412 = vpack.c.b16 %v403, %v402
    %v413 = vpack.c.b16 %v405, %v404
    %422 = vmatpush.bf16.msra.mxu0 %v413
    %423 = vmatpush.bf16.msra.mxu0 %v412
    %424 = vmatpush.bf16.msra.mxu0 %v411
    %425 = vmatpush.bf16.msra.mxu0 %v410
    %426 = vmatpush.bf16.msra.mxu0 %v409
    %427 = vmatpush.bf16.msra.mxu0 %v408
    %428 = vmatpush.bf16.msra.mxu0 %v407
    %429 = vmatpush.bf16.msra.mxu0 %v406
    %430 = vmatmul.bf16.gmra.mxu0 %v350
    %v431 = vpop.f32.mrf.mxu0
    %v432 = vadd.f32 0.0, %v431
    %v433 = vpop.f32.mrf.mxu0
    %v434 = vadd.f32 0.0, %v433
    %435 = vmatmul.bf16.gmra.mxu0 %v351
    %v436 = vpop.f32.mrf.mxu0
    %v437 = vadd.f32 0.0, %v436
    %v438 = vpop.f32.mrf.mxu0
    %v439 = vadd.f32 0.0, %v438
    %440 = vmatmul.bf16.gmra.mxu0 %v352
    %v441 = vpop.f32.mrf.mxu0
    %v442 = vadd.f32 0.0, %v441
    %v443 = vpop.f32.mrf.mxu0
    %v444 = vadd.f32 0.0, %v443
    %445 = vmatmul.bf16.gmra.mxu0 %v353
    %v446 = vpop.f32.mrf.mxu0
    %v447 = vadd.f32 0.0, %v446
    %v448 = vpop.f32.mrf.mxu0
    %v449 = vadd.f32 0.0, %v448
    %450 = vmatmul.bf16.gmra.mxu0 %v354
    %v451 = vpop.f32.mrf.mxu0
    %v452 = vadd.f32 0.0, %v451
    %v453 = vpop.f32.mrf.mxu0
    %v454 = vadd.f32 0.0, %v453
    %455 = vmatmul.bf16.gmra.mxu0 %v355
    %v456 = vpop.f32.mrf.mxu0
    %v457 = vadd.f32 0.0, %v456
    %v458 = vpop.f32.mrf.mxu0
    %v459 = vadd.f32 0.0, %v458
    %460 = vmatmul.bf16.gmra.mxu0 %v356
    %v461 = vpop.f32.mrf.mxu0
    %v462 = vadd.f32 0.0, %v461
    %v463 = vpop.f32.mrf.mxu0
    %v464 = vadd.f32 0.0, %v463
    %465 = vmatmul.bf16.gmra.mxu0 %v357
    %v466 = vpop.f32.mrf.mxu0
    %v467 = vadd.f32 0.0, %v466
    %v468 = vpop.f32.mrf.mxu0
    %v469 = vadd.f32 0.0, %v468
    %470 = vdwg.mxu0
    %v471 = vpack.c.bf16 %v434, %v432
    %v472 = vpack.c.bf16 %v439, %v437
    %v473 = vpack.c.bf16 %v444, %v442
    %v474 = vpack.c.bf16 %v449, %v447
    %v475 = vpack.c.bf16 %v454, %v452
    %v476 = vpack.c.bf16 %v459, %v457
    %v477 = vpack.c.bf16 %v464, %v462
    %v478 = vpack.c.bf16 %v469, %v467
    %v479 = vld [vmem:[%s5] sm:$0x1]
    %v481 = vperm.slane %v479, 0
    %483 = vmatpush.bf16.msra.mxu0 %v478
    %484 = vmatpush.bf16.msra.mxu0 %v477
    %485 = vmatpush.bf16.msra.mxu0 %v476
    %486 = vmatpush.bf16.msra.mxu0 %v475
    %487 = vmatpush.bf16.msra.mxu0 %v474
    %488 = vmatpush.bf16.msra.mxu0 %v473
    %489 = vmatpush.bf16.msra.mxu0 %v472
    %490 = vmatpush.bf16.msra.mxu0 %v471
    %491 = vmatmul.bf16.gmra.mxu0 %v269
    %v492 = vpop.f32.mrf.mxu0
    %v493 = vadd.f32 %v481, %v492
    %v494 = vpop.f32.mrf.mxu0
    %v495 = vadd.f32 %v481, %v494
    %496 = vmatmul.bf16.gmra.mxu0 %v270
    %v497 = vpop.f32.mrf.mxu0
    %v498 = vadd.f32 %v481, %v497
    %v499 = vpop.f32.mrf.mxu0
    %v500 = vadd.f32 %v481, %v499
    %501 = vmatmul.bf16.gmra.mxu0 %v271
    %v502 = vpop.f32.mrf.mxu0
    %v503 = vadd.f32 %v481, %v502
    %v504 = vpop.f32.mrf.mxu0
    %v505 = vadd.f32 %v481, %v504
    %506 = vmatmul.bf16.gmra.mxu0 %v272
    %v507 = vpop.f32.mrf.mxu0
    %v508 = vadd.f32 %v481, %v507
    %v509 = vpop.f32.mrf.mxu0
    %v510 = vadd.f32 %v481, %v509
    %511 = vmatmul.bf16.gmra.mxu0 %v273
    %v512 = vpop.f32.mrf.mxu0
    %v513 = vadd.f32 %v481, %v512
    %v514 = vpop.f32.mrf.mxu0
    %v515 = vadd.f32 %v481, %v514
    %516 = vmatmul.bf16.gmra.mxu0 %v274
    %v517 = vpop.f32.mrf.mxu0
    %v518 = vadd.f32 %v481, %v517
    %v519 = vpop.f32.mrf.mxu0
    %v520 = vadd.f32 %v481, %v519
    %521 = vmatmul.bf16.gmra.mxu0 %v275
    %v522 = vpop.f32.mrf.mxu0
    %v523 = vadd.f32 %v481, %v522
    %v524 = vpop.f32.mrf.mxu0
    %v525 = vadd.f32 %v481, %v524
    %526 = vmatmul.bf16.gmra.mxu0 %v276
    %v527 = vpop.f32.mrf.mxu0
    %v528 = vadd.f32 %v481, %v527
    %v529 = vpop.f32.mrf.mxu0
    %v530 = vadd.f32 %v481, %v529
    %531 = vdwg.mxu0
    %v532 = vmax.f32 %v493, 0.0
    %v533 = vmax.f32 %v495, 0.0
    %v534 = vmax.f32 %v498, 0.0
    %v535 = vmax.f32 %v500, 0.0
    %v536 = vmax.f32 %v503, 0.0
    %v537 = vmax.f32 %v505, 0.0
    %v538 = vmax.f32 %v508, 0.0
    %v539 = vmax.f32 %v510, 0.0
    %v540 = vmax.f32 %v513, 0.0
    %v541 = vmax.f32 %v515, 0.0
    %v542 = vmax.f32 %v518, 0.0
    %v543 = vmax.f32 %v520, 0.0
    %v544 = vmax.f32 %v523, 0.0
    %v545 = vmax.f32 %v525, 0.0
    %v546 = vmax.f32 %v528, 0.0
    %v547 = vmax.f32 %v530, 0.0
    %v548 = vpack.c.bf16 %v533, %v532
    %v549 = vpack.c.bf16 %v535, %v534
    %v550 = vpack.c.bf16 %v537, %v536
    %v551 = vpack.c.bf16 %v539, %v538
    %v552 = vpack.c.bf16 %v541, %v540
    %v553 = vpack.c.bf16 %v543, %v542
    %v554 = vpack.c.bf16 %v545, %v544
    %v555 = vpack.c.bf16 %v547, %v546
    %v556 = vld [vmem:[#allocation5] sm:$0xf]
    %v557 = vld [vmem:[#allocation5 + $0x4] sm:$0xf]
    %v558 = vld [vmem:[#allocation5 + $0x8] sm:$0xf]
    %v559 = vld [vmem:[#allocation5 + $0xc] sm:$0xf]
    %v560 = vld [vmem:[#allocation5 + $0x10] sm:$0xf]
    %v561 = vld [vmem:[#allocation5 + $0x14] sm:$0xf]
    %v562 = vld [vmem:[#allocation5 + $0x18] sm:$0xf]
    %v563 = vld [vmem:[#allocation5 + $0x1c] sm:$0xf]
    %v564 = vld [vmem:[#allocation5 + $0x20] sm:$0xf]
    %v565 = vld [vmem:[#allocation5 + $0x24] sm:$0xf]
    %v566 = vld [vmem:[#allocation5 + $0x28] sm:$0xf]
    %v567 = vld [vmem:[#allocation5 + $0x2c] sm:$0xf]
    %v568 = vld [vmem:[#allocation5 + $0x30] sm:$0xf]
    %v569 = vld [vmem:[#allocation5 + $0x34] sm:$0xf]
    %v570 = vld [vmem:[#allocation5 + $0x38] sm:$0xf]
    %v571 = vld [vmem:[#allocation5 + $0x3c] sm:$0xf]
    %v588 = vunpack.c.l.b16 %v556
    %v589 = vunpack.c.l.b16 %v557
    %v590 = vunpack.c.l.b16 %v558
    %v591 = vunpack.c.l.b16 %v559
    %v592 = vunpack.c.l.b16 %v560
    %v593 = vunpack.c.l.b16 %v561
    %v594 = vunpack.c.l.b16 %v562
    %v595 = vunpack.c.l.b16 %v563
    %v596 = vunpack.c.l.b16 %v564
    %v597 = vunpack.c.l.b16 %v565
    %v598 = vunpack.c.l.b16 %v566
    %v599 = vunpack.c.l.b16 %v567
    %v600 = vunpack.c.l.b16 %v568
    %v601 = vunpack.c.l.b16 %v569
    %v602 = vunpack.c.l.b16 %v570
    %v603 = vunpack.c.l.b16 %v571
    %v604 = vpack.c.b16 %v589, %v588
    %v605 = vpack.c.b16 %v591, %v590
    %v606 = vpack.c.b16 %v593, %v592
    %v607 = vpack.c.b16 %v595, %v594
    %v608 = vpack.c.b16 %v597, %v596
    %v609 = vpack.c.b16 %v599, %v598
    %v610 = vpack.c.b16 %v601, %v600
    %v611 = vpack.c.b16 %v603, %v602
    %620 = vmatpush.bf16.msra.mxu0 %v611
    %621 = vmatpush.bf16.msra.mxu0 %v610
    %622 = vmatpush.bf16.msra.mxu0 %v609
    %623 = vmatpush.bf16.msra.mxu0 %v608
    %624 = vmatpush.bf16.msra.mxu0 %v607
    %625 = vmatpush.bf16.msra.mxu0 %v606
    %626 = vmatpush.bf16.msra.mxu0 %v605
    %627 = vmatpush.bf16.msra.mxu0 %v604
    %628 = vmatmul.bf16.gmra.mxu0 %v548
    %v629 = vpop.f32.mrf.mxu0
    %v630 = vadd.f32 0.0, %v629
    %v631 = vpop.f32.mrf.mxu0
    %v632 = vadd.f32 0.0, %v631
    %633 = vmatmul.bf16.gmra.mxu0 %v549
    %v634 = vpop.f32.mrf.mxu0
    %v635 = vadd.f32 0.0, %v634
    %v636 = vpop.f32.mrf.mxu0
    %v637 = vadd.f32 0.0, %v636
    %638 = vmatmul.bf16.gmra.mxu0 %v550
    %v639 = vpop.f32.mrf.mxu0
    %v640 = vadd.f32 0.0, %v639
    %v641 = vpop.f32.mrf.mxu0
    %v642 = vadd.f32 0.0, %v641
    %643 = vmatmul.bf16.gmra.mxu0 %v551
    %v644 = vpop.f32.mrf.mxu0
    %v645 = vadd.f32 0.0, %v644
    %v646 = vpop.f32.mrf.mxu0
    %v647 = vadd.f32 0.0, %v646
    %648 = vmatmul.bf16.gmra.mxu0 %v552
    %v649 = vpop.f32.mrf.mxu0
    %v650 = vadd.f32 0.0, %v649
    %v651 = vpop.f32.mrf.mxu0
    %v652 = vadd.f32 0.0, %v651
    %653 = vmatmul.bf16.gmra.mxu0 %v553
    %v654 = vpop.f32.mrf.mxu0
    %v655 = vadd.f32 0.0, %v654
    %v656 = vpop.f32.mrf.mxu0
    %v657 = vadd.f32 0.0, %v656
    %658 = vmatmul.bf16.gmra.mxu0 %v554
    %v659 = vpop.f32.mrf.mxu0
    %v660 = vadd.f32 0.0, %v659
    %v661 = vpop.f32.mrf.mxu0
    %v662 = vadd.f32 0.0, %v661
    %663 = vmatmul.bf16.gmra.mxu0 %v555
    %v664 = vpop.f32.mrf.mxu0
    %v665 = vadd.f32 0.0, %v664
    %v666 = vpop.f32.mrf.mxu0
    %v667 = vadd.f32 0.0, %v666
    %668 = vdwg.mxu0
    %v669 = vpack.c.bf16 %v632, %v630
    %v670 = vpack.c.bf16 %v637, %v635
    %v671 = vpack.c.bf16 %v642, %v640
    %v672 = vpack.c.bf16 %v647, %v645
    %v673 = vpack.c.bf16 %v652, %v650
    %v674 = vpack.c.bf16 %v657, %v655
    %v675 = vpack.c.bf16 %v662, %v660
    %v676 = vpack.c.bf16 %v667, %v665
    %v677 = vld [vmem:[%s7] sm:$0x1]
    %v679 = vperm.slane %v677, 0
    %681 = vmatpush.bf16.msra.mxu0 %v676
    %682 = vmatpush.bf16.msra.mxu0 %v675
    %683 = vmatpush.bf16.msra.mxu0 %v674
    %684 = vmatpush.bf16.msra.mxu0 %v673
    %685 = vmatpush.bf16.msra.mxu0 %v672
    %686 = vmatpush.bf16.msra.mxu0 %v671
    %687 = vmatpush.bf16.msra.mxu0 %v670
    %688 = vmatpush.bf16.msra.mxu0 %v669
    %689 = vmatmul.bf16.gmra.mxu0 %v269
    %v690 = vpop.f32.mrf.mxu0
    %v691 = vadd.f32 %v679, %v690
    %v692 = vpop.f32.mrf.mxu0
    %v693 = vadd.f32 %v679, %v692
    %694 = vmatmul.bf16.gmra.mxu0 %v270
    %v695 = vpop.f32.mrf.mxu0
    %v696 = vadd.f32 %v679, %v695
    %v697 = vpop.f32.mrf.mxu0
    %v698 = vadd.f32 %v679, %v697
    %699 = vmatmul.bf16.gmra.mxu0 %v271
    %v700 = vpop.f32.mrf.mxu0
    %v701 = vadd.f32 %v679, %v700
    %v702 = vpop.f32.mrf.mxu0
    %v703 = vadd.f32 %v679, %v702
    %704 = vmatmul.bf16.gmra.mxu0 %v272
    %v705 = vpop.f32.mrf.mxu0
    %v706 = vadd.f32 %v679, %v705
    %v707 = vpop.f32.mrf.mxu0
    %v708 = vadd.f32 %v679, %v707
    %709 = vmatmul.bf16.gmra.mxu0 %v273
    %v710 = vpop.f32.mrf.mxu0
    %v711 = vadd.f32 %v679, %v710
    %v712 = vpop.f32.mrf.mxu0
    %v713 = vadd.f32 %v679, %v712
    %714 = vmatmul.bf16.gmra.mxu0 %v274
    %v715 = vpop.f32.mrf.mxu0
    %v716 = vadd.f32 %v679, %v715
    %v717 = vpop.f32.mrf.mxu0
    %v718 = vadd.f32 %v679, %v717
    %719 = vmatmul.bf16.gmra.mxu0 %v275
    %v720 = vpop.f32.mrf.mxu0
    %v721 = vadd.f32 %v679, %v720
    %v722 = vpop.f32.mrf.mxu0
    %v723 = vadd.f32 %v679, %v722
    %724 = vmatmul.bf16.gmra.mxu0 %v276
    %v725 = vpop.f32.mrf.mxu0
    %v726 = vadd.f32 %v679, %v725
    %v727 = vpop.f32.mrf.mxu0
    %v728 = vadd.f32 %v679, %v727
    %729 = vdwg.mxu0
    %v730 = vlaneseq
    %v731 = vand.u32 %v730, 127
    %vm732 = vcmp.lt.s32.totalorder %v731, 8
    %v733 = vsel %vm732, %v691, -1e+30
    %v734 = vsel %vm732, %v693, -1e+30
    %v735 = vsel %vm732, %v696, -1e+30
    %v736 = vsel %vm732, %v698, -1e+30
    %v737 = vsel %vm732, %v701, -1e+30
    %v738 = vsel %vm732, %v703, -1e+30
    %v739 = vsel %vm732, %v706, -1e+30
    %v740 = vsel %vm732, %v708, -1e+30
    %v741 = vsel %vm732, %v711, -1e+30
    %v742 = vsel %vm732, %v713, -1e+30
    %v743 = vsel %vm732, %v716, -1e+30
    %v744 = vsel %vm732, %v718, -1e+30
    %v745 = vsel %vm732, %v721, -1e+30
    %v746 = vsel %vm732, %v723, -1e+30
    %v747 = vsel %vm732, %v726, -1e+30
    %v748 = vsel %vm732, %v728, -1e+30
    %749 = vmax.xlane.f32.xlu0 %v733
    %v750 = vpop.xlane.xlu0 %749
    %751 = vmax.xlane.f32.xlu0 %v734
    %v752 = vpop.xlane.xlu0 %751
    %753 = vmax.xlane.f32.xlu0 %v735
    %v754 = vpop.xlane.xlu0 %753
    %755 = vmax.xlane.f32.xlu0 %v736
    %v756 = vpop.xlane.xlu0 %755
    %757 = vmax.xlane.f32.xlu0 %v737
    %v758 = vpop.xlane.xlu0 %757
    %759 = vmax.xlane.f32.xlu0 %v738
    %v760 = vpop.xlane.xlu0 %759
    %761 = vmax.xlane.f32.xlu0 %v739
    %v762 = vpop.xlane.xlu0 %761
    %763 = vmax.xlane.f32.xlu0 %v740
    %v764 = vpop.xlane.xlu0 %763
    %765 = vmax.xlane.f32.xlu0 %v741
    %v766 = vpop.xlane.xlu0 %765
    %767 = vmax.xlane.f32.xlu0 %v742
    %v768 = vpop.xlane.xlu0 %767
    %769 = vmax.xlane.f32.xlu0 %v743
    %v770 = vpop.xlane.xlu0 %769
    %771 = vmax.xlane.f32.xlu0 %v744
    %v772 = vpop.xlane.xlu0 %771
    %773 = vmax.xlane.f32.xlu0 %v745
    %v774 = vpop.xlane.xlu0 %773
    %775 = vmax.xlane.f32.xlu0 %v746
    %v776 = vpop.xlane.xlu0 %775
    %777 = vmax.xlane.f32.xlu0 %v747
    %v778 = vpop.xlane.xlu0 %777
    %779 = vmax.xlane.f32.xlu0 %v748
    %v780 = vpop.xlane.xlu0 %779
    %v781 = vsub.f32 %v733, %v750
    %v782 = vsub.f32 %v734, %v752
    %v783 = vsub.f32 %v735, %v754
    %v784 = vsub.f32 %v736, %v756
    %v785 = vsub.f32 %v737, %v758
    %v786 = vsub.f32 %v738, %v760
    %v787 = vsub.f32 %v739, %v762
    %v788 = vsub.f32 %v740, %v764
    %v789 = vsub.f32 %v741, %v766
    %v790 = vsub.f32 %v742, %v768
    %v791 = vsub.f32 %v743, %v770
    %v792 = vsub.f32 %v744, %v772
    %v793 = vsub.f32 %v745, %v774
    %v794 = vsub.f32 %v746, %v776
    %v795 = vsub.f32 %v747, %v778
    %v796 = vsub.f32 %v748, %v780
    %v797 = vmul.f32 %v781, 1.442695
    %v798 = vpow.pop %v797
    %v799 = vmul.f32 %v782, 1.442695
    %v800 = vpow.pop %v799
    %v801 = vmul.f32 %v783, 1.442695
    %v802 = vpow.pop %v801
    %v803 = vmul.f32 %v784, 1.442695
    %v804 = vpow.pop %v803
    %v805 = vmul.f32 %v785, 1.442695
    %v806 = vpow.pop %v805
    %v807 = vmul.f32 %v786, 1.442695
    %v808 = vpow.pop %v807
    %v809 = vmul.f32 %v787, 1.442695
    %v810 = vpow.pop %v809
    %v811 = vmul.f32 %v788, 1.442695
    %v812 = vpow.pop %v811
    %v813 = vmul.f32 %v789, 1.442695
    %v814 = vpow.pop %v813
    %v815 = vmul.f32 %v790, 1.442695
    %v816 = vpow.pop %v815
    %v817 = vmul.f32 %v791, 1.442695
    %v818 = vpow.pop %v817
    %v819 = vmul.f32 %v792, 1.442695
    %v820 = vpow.pop %v819
    %v821 = vmul.f32 %v793, 1.442695
    %v822 = vpow.pop %v821
    %v823 = vmul.f32 %v794, 1.442695
    %v824 = vpow.pop %v823
    %v825 = vmul.f32 %v795, 1.442695
    %v826 = vpow.pop %v825
    %v827 = vmul.f32 %v796, 1.442695
    %v828 = vpow.pop %v827
    %829 = vadd.xlane.f32.xlu0 %v798
    %v830 = vpop.xlane.xlu0 %829
    %831 = vadd.xlane.f32.xlu0 %v800
    %v832 = vpop.xlane.xlu0 %831
    %833 = vadd.xlane.f32.xlu0 %v802
    %v834 = vpop.xlane.xlu0 %833
    %835 = vadd.xlane.f32.xlu0 %v804
    %v836 = vpop.xlane.xlu0 %835
    %837 = vadd.xlane.f32.xlu0 %v806
    %v838 = vpop.xlane.xlu0 %837
    %839 = vadd.xlane.f32.xlu0 %v808
    %v840 = vpop.xlane.xlu0 %839
    %841 = vadd.xlane.f32.xlu0 %v810
    %v842 = vpop.xlane.xlu0 %841
    %843 = vadd.xlane.f32.xlu0 %v812
    %v844 = vpop.xlane.xlu0 %843
    %845 = vadd.xlane.f32.xlu0 %v814
    %v846 = vpop.xlane.xlu0 %845
    %847 = vadd.xlane.f32.xlu0 %v816
    %v848 = vpop.xlane.xlu0 %847
    %849 = vadd.xlane.f32.xlu0 %v818
    %v850 = vpop.xlane.xlu0 %849
    %851 = vadd.xlane.f32.xlu0 %v820
    %v852 = vpop.xlane.xlu0 %851
    %853 = vadd.xlane.f32.xlu0 %v822
    %v854 = vpop.xlane.xlu0 %853
    %855 = vadd.xlane.f32.xlu0 %v824
    %v856 = vpop.xlane.xlu0 %855
    %857 = vadd.xlane.f32.xlu0 %v826
    %v858 = vpop.xlane.xlu0 %857
    %859 = vadd.xlane.f32.xlu0 %v828
    %v860 = vpop.xlane.xlu0 %859
    %v861 = vlog2.pop %v830
    %v862 = vmul.f32 %v861, 0.6931472
    %v863 = vlog2.pop %v832
    %v864 = vmul.f32 %v863, 0.6931472
    %v865 = vlog2.pop %v834
    %v866 = vmul.f32 %v865, 0.6931472
    %v867 = vlog2.pop %v836
    %v868 = vmul.f32 %v867, 0.6931472
    %v869 = vlog2.pop %v838
    %v870 = vmul.f32 %v869, 0.6931472
    %v871 = vlog2.pop %v840
    %v872 = vmul.f32 %v871, 0.6931472
    %v873 = vlog2.pop %v842
    %v874 = vmul.f32 %v873, 0.6931472
    %v875 = vlog2.pop %v844
    %v876 = vmul.f32 %v875, 0.6931472
    %v877 = vlog2.pop %v846
    %v878 = vmul.f32 %v877, 0.6931472
    %v879 = vlog2.pop %v848
    %v880 = vmul.f32 %v879, 0.6931472
    %v881 = vlog2.pop %v850
    %v882 = vmul.f32 %v881, 0.6931472
    %v883 = vlog2.pop %v852
    %v884 = vmul.f32 %v883, 0.6931472
    %v885 = vlog2.pop %v854
    %v886 = vmul.f32 %v885, 0.6931472
    %v887 = vlog2.pop %v856
    %v888 = vmul.f32 %v887, 0.6931472
    %v889 = vlog2.pop %v858
    %v890 = vmul.f32 %v889, 0.6931472
    %v891 = vlog2.pop %v860
    %v892 = vmul.f32 %v891, 0.6931472
    %v893 = vsub.f32 %v781, %v862
    %v894 = vsub.f32 %v782, %v864
    %v895 = vsub.f32 %v783, %v866
    %v896 = vsub.f32 %v784, %v868
    %v897 = vsub.f32 %v785, %v870
    %v898 = vsub.f32 %v786, %v872
    %v899 = vsub.f32 %v787, %v874
    %v900 = vsub.f32 %v788, %v876
    %v901 = vsub.f32 %v789, %v878
    %v902 = vsub.f32 %v790, %v880
    %v903 = vsub.f32 %v791, %v882
    %v904 = vsub.f32 %v792, %v884
    %v905 = vsub.f32 %v793, %v886
    %v906 = vsub.f32 %v794, %v888
    %v907 = vsub.f32 %v795, %v890
    %v908 = vsub.f32 %v796, %v892
    %v909 = vsel %vm732, %v893, 0.0
    %v910 = vsel %vm732, %v894, 0.0
    %v911 = vsel %vm732, %v895, 0.0
    %v912 = vsel %vm732, %v896, 0.0
    %v913 = vsel %vm732, %v897, 0.0
    %v914 = vsel %vm732, %v898, 0.0
    %v915 = vsel %vm732, %v899, 0.0
    %v916 = vsel %vm732, %v900, 0.0
    %v917 = vsel %vm732, %v901, 0.0
    %v918 = vsel %vm732, %v902, 0.0
    %v919 = vsel %vm732, %v903, 0.0
    %v920 = vsel %vm732, %v904, 0.0
    %v921 = vsel %vm732, %v905, 0.0
    %v922 = vsel %vm732, %v906, 0.0
    %v923 = vsel %vm732, %v907, 0.0
    %v924 = vsel %vm732, %v908, 0.0
    %v925 = vpack.c.bf16 %v909, %v909
    %v926 = vpack.c.bf16 %v910, %v910
    %v927 = vpack.c.bf16 %v911, %v911
    %v928 = vpack.c.bf16 %v912, %v912
    %v929 = vpack.c.bf16 %v913, %v913
    %v930 = vpack.c.bf16 %v914, %v914
    %v931 = vpack.c.bf16 %v915, %v915
    %v932 = vpack.c.bf16 %v916, %v916
    %v933 = vpack.c.bf16 %v917, %v917
    %v934 = vpack.c.bf16 %v918, %v918
    %v935 = vpack.c.bf16 %v919, %v919
    %v936 = vpack.c.bf16 %v920, %v920
    %v937 = vpack.c.bf16 %v921, %v921
    %v938 = vpack.c.bf16 %v922, %v922
    %v939 = vpack.c.bf16 %v923, %v923
    %v940 = vpack.c.bf16 %v924, %v924
    %941 = vst [vmem:[#allocation7] sm:$0xf] %v925
    %942 = vst [vmem:[#allocation7 + $0x4] sm:$0xf] %v926
    %943 = vst [vmem:[#allocation7 + $0x8] sm:$0xf] %v927
    %944 = vst [vmem:[#allocation7 + $0xc] sm:$0xf] %v928
    %945 = vst [vmem:[#allocation7 + $0x10] sm:$0xf] %v929
    %946 = vst [vmem:[#allocation7 + $0x14] sm:$0xf] %v930
    %947 = vst [vmem:[#allocation7 + $0x18] sm:$0xf] %v931
    %948 = vst [vmem:[#allocation7 + $0x1c] sm:$0xf] %v932
    %949 = vst [vmem:[#allocation7 + $0x20] sm:$0xf] %v933
    %950 = vst [vmem:[#allocation7 + $0x24] sm:$0xf] %v934
    %951 = vst [vmem:[#allocation7 + $0x28] sm:$0xf] %v935
    %952 = vst [vmem:[#allocation7 + $0x2c] sm:$0xf] %v936
    %953 = vst [vmem:[#allocation7 + $0x30] sm:$0xf] %v937
    %954 = vst [vmem:[#allocation7 + $0x34] sm:$0xf] %v938
    %955 = vst [vmem:[#allocation7 + $0x38] sm:$0xf] %v939
    %956 = vst [vmem:[#allocation7 + $0x3c] sm:$0xf] %v940
    // Predicated region
    $region42: #{tpu_custom_call.1} parent=1 // pred_check
      _
    $region43: #{tpu_custom_call.1} parent=1 // pred_check_branch
      %958 = sbr.rel (0) target = $region45
    $region44: #{tpu_custom_call.1} parent=1 // pred_region
      %960 = vsyncadd [#allocation4], 0
      %s961 = sshll.u32 [#allocation7], 4
      %s962 = int_to_ptr.vmem [resolvable:$true] %s961
      %s963 = sshll.u32 %s8, 4
      %s964 = int_to_ptr.hbm [resolvable:$true] %s963
      %969 = dma.vmem_to_hbm [thread:$0]  %s962, 1024, %s964, [#allocation4], 64, 64, 4
    $region45: #{tpu_custom_call.1} parent=1 // pred_fallthru
      _
    // Predicated region
    $region46: #{tpu_custom_call.1} parent=1 // pred_check
      _
    $region47: #{tpu_custom_call.1} parent=1 // pred_check_branch
      %971 = sbr.rel (0) target = $region49
    $region48: #{tpu_custom_call.1} parent=1 // pred_region
      %973 = dma.done [#allocation4], 1024
    $region49: #{tpu_custom_call.1} parent=1 // pred_fallthru
      _
    %974 = vsyncpa [#allocation3], 1
    %975 = vsyncpa [#allocation6], 1
    %976 = vsyncpa [#allocation4], 1

</llo_original>
